<compile_context>
chip_gen: v6e
topology: v6e:2x2x1
jax: 0.10.0
libtpu: 0.0.40
codegen_flags: <defaults>
</compile_context>

<pallas_src>
import jax
import jax.numpy as jnp
from jax.experimental import pallas as pl
from jax.experimental.pallas import tpu as pltpu

_LANES = 128
_SUBLANES = 8
_TARGET_BLOCK_BYTES = 4 * 1024 * 1024   # ~4 MiB blocks (good on v5e/v6e/v7x)
_MIN_STEPS = 4                          # >= 2 pipelined steps per v7x TensorCore


def _choose_2d(n, sub):
    """Lane-dense (rows, cols) factorization of n (requires n % 128 == 0).

    Prefer row counts that are a multiple of the dtype's sublane packing and
    large enough for >= _MIN_STEPS grid steps; prefer wider lanes after that.
    """
    best_key, best = None, None
    for cols in (4096, 2048, 1024, 512, 256, 128):
        if n % cols:
            continue
        rows = n // cols
        key = (rows % sub == 0, rows >= _MIN_STEPS * sub, cols)
        if best_key is None or key > best_key:
            best_key, best = key, (rows, cols)
    return best


def _pick_tile_rows(rows, cols, dt_bytes, sub):
    """Rows per block: ~4 MiB blocks, >= _MIN_STEPS (even) grid steps if possible."""
    if rows <= sub:
        return rows                                  # single full-dims block
    # ~4 MiB per block, rounded down to the dtype's native sublane packing.
    tile_r = max(sub, (_TARGET_BLOCK_BYTES // (cols * dt_bytes) // sub) * sub)
    # Force >= _MIN_STEPS grid steps when the row count allows it (pipelining
    # plus 2-per-core work on v7x megacore).
    if rows >= _MIN_STEPS * sub:
        tile_r = min(tile_r, max(sub, ((rows // _MIN_STEPS) // sub) * sub))
    tile_r = min(tile_r, (rows // sub) * sub)
    # Prefer an even step count so v7x's two TensorCores stay balanced.
    steps = -(-rows // tile_r)
    if steps % 2 and tile_r > sub:
        cand = tile_r - sub
        if (-(-rows // cand)) % 2 == 0:
            tile_r = cand
    return tile_r


def _neg_scale_kernel(neg_coeff_ref, g_ref, o_ref):
    c = neg_coeff_ref[0, 0]                          # f32 runtime scalar (SMEM)
    o_ref[...] = (g_ref[...] * c).astype(o_ref.dtype)


def _neg_scale_pallas_2d(g2d, neg_coeff_11):
    rows, cols = g2d.shape
    dt = g2d.dtype
    dt_bytes = jnp.dtype(dt).itemsize
    sub = max(_SUBLANES, 32 // dt_bytes)             # 8 f32 / 16 bf16 / 32 int8
    tile_r = _pick_tile_rows(rows, cols, dt_bytes, sub)
    grid = (pl.cdiv(rows, tile_r),)

    return pl.pallas_call(
        _neg_scale_kernel,
        out_shape=jax.ShapeDtypeStruct((rows, cols), dt),
        grid=grid,
        in_specs=[
            pl.BlockSpec(memory_space=pltpu.MemorySpace.SMEM),   # -coeff scalar
            pl.BlockSpec((tile_r, cols), lambda i: (i, 0)),      # cotangent tile
        ],
        out_specs=pl.BlockSpec((tile_r, cols), lambda i: (i, 0)),
        input_output_aliases={1: 0},                 # donate cotangent buffer
        compiler_params=pltpu.CompilerParams(
            dimension_semantics=("parallel",),
            vmem_limit_bytes=32 * 1024 * 1024,
        ),
    )(neg_coeff_11, g2d)


def _neg_scale(g, coeff):
    """dx = -coeff * g. coeff is a traced f32 scalar (no recompiles per value)."""
    neg_coeff = (-coeff).astype(jnp.float32)
    if g.size == 0:
        return g
    if g.size % _LANES != 0:
        # Ragged element count: masked partial stores, 8x sublane waste and an
        # unbounded single-block VMEM footprint make Pallas a net loss here; a
        # plain (fusable) jnp multiply is strictly better.
        return (g * neg_coeff).astype(g.dtype)
    sub = max(_SUBLANES, 32 // jnp.dtype(g.dtype).itemsize)
    rows, cols = _choose_2d(g.size, sub)
    out = _neg_scale_pallas_2d(g.reshape(rows, cols), neg_coeff.reshape(1, 1))
    return out.reshape(g.shape)


# ---------------------------------------------------------------------------
# custom_vjp wiring: forward identity, backward -coeff * g (coeff grad = None)
# ---------------------------------------------------------------------------
@jax.custom_vjp
def _gradient_reverse(x, coeff):
    # forward: y = x * 1.0 (identity). Returning x avoids a useless HBM pass.
    return x


def _grl_fwd(x, coeff):
    return x, coeff


def _grl_bwd(coeff, g):
    # coeff receives no gradient (PyTorch returns None for it).
    return _neg_scale(g, coeff), jnp.zeros_like(coeff)


_gradient_reverse.defvjp(_grl_fwd, _grl_bwd)


def gradient_reverse(x, coeff=1.0):
    # coeff flows as a runtime f32 scalar: ramping coeff every training step
    # does NOT retrace or recompile the backward kernel.
    return _gradient_reverse(x, jnp.asarray(coeff, dtype=jnp.float32))


class GradientReverseLayer:
    """JAX/Pallas equivalent of the PyTorch GradientReverseLayer module."""

    def __call__(self, x, coeff=1.0):
        return gradient_reverse(x, coeff)


# ---------------------------------------------------------------------------
# Demo / smoke test
# ---------------------------------------------------------------------------
if __name__ == "__main__":
    grl = GradientReverseLayer()

    # --- primary test: small NCHW f32, coeff=0.5 ----------------------------
    x = jax.random.normal(jax.random.PRNGKey(0), (2, 4, 16, 16), jnp.float32)
    y = grl(x, 0.5)
    jax.block_until_ready(y)
    assert y.shape == x.shape and y.dtype == x.dtype
    assert jnp.allclose(y, x), "forward must be identity"

    grad_x = jax.grad(lambda a: jnp.sum(grl(a, 0.5)))(x)
    jax.block_until_ready(grad_x)
    assert grad_x.dtype == x.dtype
    assert jnp.allclose(grad_x, -0.5 * jnp.ones_like(x)), "backward must be -coeff*g"

    # --- runtime coeff under one jit trace (no recompile per coeff value) ---
    @jax.jit
    def loss_grad(a, c):
        return jax.grad(lambda t: jnp.sum(grl(t, c) * 2.0))(a)

    x2 = jax.random.normal(jax.random.PRNGKey(1), (8, 8, 32, 32), jnp.float32)
    g_a = loss_grad(x2, 0.25)
    g_b = loss_grad(x2, 1.5)       # same compiled fn, different coeff value
    jax.block_until_ready((g_a, g_b))
    assert jnp.allclose(g_a, -0.25 * 2.0 * jnp.ones_like(x2))
    assert jnp.allclose(g_b, -1.5 * 2.0 * jnp.ones_like(x2))

    # --- bf16 gradients through the Pallas path (128-aligned size) ----------
    x3 = jax.random.normal(jax.random.PRNGKey(2), (4, 8, 16, 16), jnp.bfloat16)
    g3 = jax.grad(lambda a: jnp.sum(grl(a, 0.5).astype(jnp.float32)))(x3)
    jax.block_until_ready(g3)
    assert g3.dtype == jnp.bfloat16
    assert jnp.allclose(g3.astype(jnp.float32),
                        -0.5 * jnp.ones(x3.shape, jnp.float32))

    # --- ragged element count -> documented jnp fallback ---------------------
    x4 = jax.random.normal(jax.random.PRNGKey(3), (3, 5, 7), jnp.bfloat16)
    g4 = jax.grad(lambda a: jnp.sum(grl(a, 0.5).astype(jnp.float32)))(x4)
    jax.block_until_ready(g4)
    assert g4.dtype == jnp.bfloat16
    assert jnp.allclose(g4.astype(jnp.float32),
                        -0.5 * jnp.ones(x4.shape, jnp.float32))

    print("KERNEL_OK")
</pallas_src>

<mosaic_0001>
module attributes {stable_mosaic.version = 11 : i64} {
  func.func @_neg_scale_kernel(%arg0: i32, %arg1: memref<1x1xf32, #tpu.memory_space<smem>>, %arg2: memref<8x256xf32, #tpu.memory_space<vmem>>, %arg3: memref<8x256xf32, #tpu.memory_space<vmem>>) attributes {dimension_semantics = [#tpu.dimension_semantics<parallel>], iteration_bounds = array<i64: 1>, scalar_prefetch = 0 : i64, scratch_operands = 0 : i64, tpu.core_type = #tpu.core_type<tc>, window_params = [{transform_indices = @transform_0, window_bounds = array<i64: 1, 1>}, {transform_indices = @transform_1, window_bounds = array<i64: 8, 256>}, {transform_indices = @transform_2, window_bounds = array<i64: 8, 256>}]} {
    %c0 = arith.constant 0 : index
    %c0_0 = arith.constant 0 : index
    %0 = memref.load %arg1[%c0, %c0_0] : memref<1x1xf32, #tpu.memory_space<smem>>
    %c0_1 = arith.constant 0 : index
    %c0_2 = arith.constant 0 : index
    %1 = vector.load %arg2[%c0_1, %c0_2] : memref<8x256xf32, #tpu.memory_space<vmem>>, vector<8x256xf32>
    %2 = vector.broadcast %0 : f32 to vector<8x256xf32>
    %3 = arith.mulf %1, %2 : vector<8x256xf32>
    %c0_3 = arith.constant 0 : index
    %c0_4 = arith.constant 0 : index
    %4 = vector.load %arg3[%c0_3, %c0_4] : memref<8x256xf32, #tpu.memory_space<vmem>>, vector<8x256xf32>
    tpu.vector_store %arg3[%c0_3, %c0_4], %3 {strides = array<i32>} : memref<8x256xf32, #tpu.memory_space<vmem>>, vector<8x256xf32>,
    return
  }
  func.func @transform_0(%arg0: i32) -> (i32, i32) {
    %c0_i32 = arith.constant 0 : i32
    %c0_i32_0 = arith.constant 0 : i32
    %c0_i32_1 = arith.constant 0 : i32
    return %c0_i32, %c0_i32_0 : i32, i32
  }
  func.func @transform_1(%arg0: i32) -> (i32, i32) {
    %c0_i32 = arith.constant 0 : i32
    %c0_i32_0 = arith.constant 0 : i32
    return %arg0, %c0_i32 : i32, i32
  }
  func.func @transform_2(%arg0: i32) -> (i32, i32) {
    %c0_i32 = arith.constant 0 : i32
    %c0_i32_0 = arith.constant 0 : i32
    return %arg0, %c0_i32 : i32, i32
  }
}

</mosaic_0001>

<llo_original>
// kernel: tpu_custom_call.1
$region0: #{tpu_custom_call.1}
  #allocation0 [shape = 'u32[]', space=smem, size = 0x4, offset = 0x4, fixed_abs, tag = 'smem constant byte address 0x4 - core index']
  #allocation1 [shape = 'u32[144,128]{1,0:T(1,128)}', space=vmem, size = 0x12000, scoped, tag = 'internal scratch']
  #allocation2 [shape = 'f32[1,1]{1,0:T(1,128)S(6)}', space=smem, size = 0x200, scoped, tag = 'scoped memory for tpu_custom_call.1']
  %s0 = inlined_call_operand.<no memory space> [shape: f32[1,1], index: 0, kind: input, shape index: {}]
  %s1 = inlined_call_operand.hbm [shape: f32[8,256], index: 1, kind: input, shape index: {}, may-alias: {1,2}]
  %s2 = inlined_call_operand.hbm [shape: f32[8,256], index: 2, kind: output, shape index: {}, may-alias: {1,2}]
  %s3 = sld [smem:[#allocation0]]
  $region22: #{tpu_custom_call.1} parent=0
    _
  %s5 = ssub.s32 1, %s3
  %s6 = scalar_select 0, %s5, %s3
  %7 = sst [smem:[#allocation2]] %s0
  $region1: #{tpu_custom_call.1} parent=0
    #allocation3 [shape = 'u8[8192]{0}', space=vmem, size = 0x2000, scoped, tag = 'input window, operand 1, single buffered']
    #allocation4 [shape = 's32[1]{0}', space=sflag, size = 0x4, scoped, tag = 'scoped memory for tpu_custom_call.1']
    #allocation5 [shape = 's32[1]{0}', space=sflag, size = 0x4, scoped, tag = 'scoped memory for tpu_custom_call.1']
    #allocation6 [shape = 'u8[8192]{0}', space=vmem, size = 0x2000, scoped, tag = 'output window, operand 0, single buffered']
    %8 = vsyncpa [#allocation4], 0
    %9 = vsyncpa [#allocation5], 0
    // Predicated region
    $region2: #{tpu_custom_call.1} parent=1 // pred_check
      _
    $region3: #{tpu_custom_call.1} parent=1 // pred_check_branch
      %11 = sbr.rel (0) target = $region5
    $region4: #{tpu_custom_call.1} parent=1 // pred_region
      _
    $region5: #{tpu_custom_call.1} parent=1 // pred_fallthru
      _
    // Predicated region
    $region6: #{tpu_custom_call.1} parent=1 // pred_check
      _
    $region7: #{tpu_custom_call.1} parent=1 // pred_check_branch
      %13 = sbr.rel (0) target = $region9
    $region8: #{tpu_custom_call.1} parent=1 // pred_region
      %s15 = ssub.s32 256, 256
      %16 = vsyncadd [#allocation4], %s15
      %s18 = sshll.u32 [#allocation3], 4
      %s19 = int_to_ptr.vmem [resolvable:$true] %s18
      %21 = dma.hbm_to_vmem [thread:$0]  %s1, 256, %s19, [#allocation4]
    $region9: #{tpu_custom_call.1} parent=1 // pred_fallthru
      _
    // Predicated region
    $region10: #{tpu_custom_call.1} parent=1 // pred_check
      _
    $region11: #{tpu_custom_call.1} parent=1 // pred_check_branch
      %23 = sbr.rel (0) target = $region13
    $region12: #{tpu_custom_call.1} parent=1 // pred_region
      %24 = dma.done [#allocation4], 256
    $region13: #{tpu_custom_call.1} parent=1 // pred_fallthru
      _
    %s25 = sld [smem:[#allocation2]]
    %v26 = vld [vmem:[#allocation3] sm:$0xff]
    %v27 = vld [vmem:[#allocation3 + $0x8] sm:$0xff]
    %v28 = vstv %s25
    %v29 = vmul.f32 %v26, %v28
    %v30 = vmul.f32 %v27, %v28
    %31 = vst [vmem:[#allocation6] sm:$0xff] %v29
    %32 = vst [vmem:[#allocation6 + $0x8] sm:$0xff] %v30
    // Predicated region
    $region14: #{tpu_custom_call.1} parent=1 // pred_check
      _
    $region15: #{tpu_custom_call.1} parent=1 // pred_check_branch
      %34 = sbr.rel (0) target = $region17
    $region16: #{tpu_custom_call.1} parent=1 // pred_region
      %s36 = ssub.s32 256, 256
      %37 = vsyncadd [#allocation5], %s36
      %s39 = sshll.u32 [#allocation6], 4
      %s40 = int_to_ptr.vmem [resolvable:$true] %s39
      %42 = dma.vmem_to_hbm [thread:$0]  %s40, 256, %s2, [#allocation5]
    $region17: #{tpu_custom_call.1} parent=1 // pred_fallthru
      _
    // Predicated region
    $region18: #{tpu_custom_call.1} parent=1 // pred_check
      _
    $region19: #{tpu_custom_call.1} parent=1 // pred_check_branch
      %44 = sbr.rel (0) target = $region21
    $region20: #{tpu_custom_call.1} parent=1 // pred_region
      %45 = dma.done [#allocation5], 256
    $region21: #{tpu_custom_call.1} parent=1 // pred_fallthru
      _
    %46 = vsyncpa [#allocation4], 1
    %47 = vsyncpa [#allocation5], 1

</llo_original>
